<compile_context>
chip_gen: v5e
topology: v5e:2x2
jax: 0.10.0
libtpu: 0.0.40
codegen_flags: <defaults>
</compile_context>

<pallas_src>
import jax
import jax.numpy as jnp
from jax.experimental import pallas as pl
from jax.experimental.pallas import tpu as pltpu

# Tile caps, re-derived for v7x's 64 MiB VMEM: worst case here is
# 2*(tm*tk + tk*tn)*2B (double-buffered bf16 inputs) + 2*tm*tn*4B (f32 output)
# ~= 12 MiB, comfortably under the 48 MiB scoped limit requested below.
_TM_MAX = 512
_TN_MAX = 1024
_TK_MAX = 1024
_VMEM_LIMIT_BYTES = 48 * 1024 * 1024


def _round_up(x, m):
    return ((x + m - 1) // m) * m


# ---------------------------------------------------------------------------
# Kernel 1: h = relu(x @ w + b); w is already transposed to (K, N) in the
# wrapper.  x/w may be bf16; accumulation is f32 directly into the f32 output
# block (no scratch), bias + ReLU fused in the last-K epilogue.
# ---------------------------------------------------------------------------
def _linear_relu_kernel(x_ref, w_ref, b_ref, o_ref):
    k = pl.program_id(2)

    @pl.when(k == 0)
    def _():
        o_ref[...] = jnp.zeros_like(o_ref)

    o_ref[...] += jnp.dot(x_ref[...], w_ref[...],
                          preferred_element_type=jnp.float32)

    @pl.when(k == pl.num_programs(2) - 1)
    def _():
        o_ref[...] = jnp.maximum(o_ref[...] + b_ref[...], 0.0)


def _linear_relu_padded(xp, wtp, bp, *, tm, tn, tk):
    """relu(xp @ wtp + bp) on pre-padded operands; returns the padded f32 output."""
    Mp, Kp = xp.shape
    Kp2, Np = wtp.shape
    assert Kp == Kp2 and bp.shape == (1, Np)
    grid = (Mp // tm, Np // tn, Kp // tk)
    cost = pl.CostEstimate(
        flops=2 * Mp * Kp * Np,
        transcendentals=0,
        bytes_accessed=int(xp.size * xp.dtype.itemsize
                           + wtp.size * wtp.dtype.itemsize
                           + bp.size * 4 + Mp * Np * 4))
    return pl.pallas_call(
        _linear_relu_kernel,
        out_shape=jax.ShapeDtypeStruct((Mp, Np), jnp.float32),
        grid_spec=pltpu.PrefetchScalarGridSpec(
            num_scalar_prefetch=0,
            grid=grid,
            in_specs=[
                pl.BlockSpec((tm, tk), lambda i, j, k: (i, k)),   # x
                pl.BlockSpec((tk, tn), lambda i, j, k: (k, j)),   # w, already (K, N)
                pl.BlockSpec((1, tn), lambda i, j, k: (0, j)),    # bias
            ],
            out_specs=pl.BlockSpec((tm, tn), lambda i, j, k: (i, j))),
        compiler_params=pltpu.CompilerParams(
            dimension_semantics=("parallel", "parallel", "arbitrary"),
            vmem_limit_bytes=_VMEM_LIMIT_BYTES),
        cost_estimate=cost,
    )(xp, wtp, bp)


# ---------------------------------------------------------------------------
# Kernel 2: gather-based neighbor-mean aggregation.
#   out[i] = sum_d  w[d, i] * h[idx[d, i]]     with  w = mask / deg
# idx is scalar-prefetched into SMEM and used as a data-dependent block index
# on h; the 1/deg scaling is fused as the per-step SMEM scalar w[d, i].
# ---------------------------------------------------------------------------
def _gather_mean_kernel(idx_ref, w_ref, h_ref, o_ref):
    del idx_ref  # only used by the index_maps
    i = pl.program_id(0)
    d = pl.program_id(1)

    @pl.when(d == 0)
    def _():
        o_ref[...] = jnp.zeros_like(o_ref)

    o_ref[...] += w_ref[d, i] * h_ref[...]


def _gather_mean(h_padded, nbr_idx_t, nbr_w_t, n_nodes):
    Mp, Dp = h_padded.shape
    max_deg = nbr_idx_t.shape[0]
    # Keep the gathered (row) axis outside the last two dims so the size-1 row
    # block satisfies the (8, 128) tiling constraint; Dp is lane-dense (128k).
    h3 = h_padded.reshape(Mp, 1, Dp)
    cost = pl.CostEstimate(
        flops=2 * n_nodes * max_deg * Dp,
        transcendentals=0,
        bytes_accessed=int((n_nodes * max_deg * Dp + n_nodes * Dp) * 4))
    out3 = pl.pallas_call(
        _gather_mean_kernel,
        out_shape=jax.ShapeDtypeStruct((n_nodes, 1, Dp), jnp.float32),
        grid_spec=pltpu.PrefetchScalarGridSpec(
            num_scalar_prefetch=1,                                  # nbr_idx_t
            grid=(n_nodes, max_deg),
            in_specs=[
                pl.BlockSpec(memory_space=pltpu.MemorySpace.SMEM),  # nbr_w_t
                pl.BlockSpec((1, 1, Dp),
                             lambda i, d, idx: (idx[d, i], 0, 0)),  # h row gather
            ],
            out_specs=pl.BlockSpec((1, 1, Dp), lambda i, d, idx: (i, 0, 0))),
        compiler_params=pltpu.CompilerParams(
            dimension_semantics=("parallel", "arbitrary"),
            vmem_limit_bytes=_VMEM_LIMIT_BYTES),
        cost_estimate=cost,
    )(nbr_idx_t, nbr_w_t, h3)
    return out3.reshape(n_nodes, Dp)


# ---------------------------------------------------------------------------
# Full GraphConvolution forward (eval mode, activation = ReLU).
# ---------------------------------------------------------------------------
def graph_convolution_forward(feats, weight, bias, nbr_idx, nbr_mask,
                              *, compute_dtype=jnp.bfloat16):
    """
    feats:    [N, dim_in]  f32
    weight:   [dim_out, dim_in]   (PyTorch nn.Linear layout)
    bias:     [dim_out]
    nbr_idx:  [N, max_deg] int32, padded neighbor indices (edge_dict, padded)
    nbr_mask: [N, max_deg] bool,  True where a real neighbor
    """
    n_nodes, dim_in = feats.shape
    dim_out = weight.shape[0]
    assert weight.shape == (dim_out, dim_in)

    # ---- tile selection (bf16 packs 16 rows per sublane group) ----
    gran_m = 16 if compute_dtype == jnp.bfloat16 else 8
    tm = min(_TM_MAX, _round_up(n_nodes, gran_m))
    # Best-effort: if everything fits one M tile, split it in two so both v7x
    # TensorCores get work (costs at most one extra ~0.35us grid step).
    if _round_up(n_nodes, tm) == tm and tm // 2 >= gran_m and (tm // 2) % gran_m == 0:
        tm //= 2
    tn = min(_TN_MAX, _round_up(dim_out, 256 if dim_out > 128 else 128))
    tk = min(_TK_MAX, _round_up(dim_in, 256))   # fill the 256-deep v6e/v7x MXU
    Mp = _round_up(n_nodes, tm)
    Np = _round_up(dim_out, tn)
    Kp = _round_up(dim_in, tk)

    # ---- constants: transpose / pad / cast once (amortized across calls) ----
    wt = weight.T                                       # one-time (K, N) transpose
    if (Kp, Np) != (dim_in, dim_out):
        wt = jnp.pad(wt, ((0, Kp - dim_in), (0, Np - dim_out)))
    wt = wt.astype(compute_dtype)
    bp = bias.astype(jnp.float32)
    if Np != dim_out:
        bp = jnp.pad(bp, (0, Np - dim_out))
    bp = bp.reshape(1, Np)

    # ---- activations: pad / cast only when needed ----
    xp = feats
    if (Mp, Kp) != (n_nodes, dim_in):
        xp = jnp.pad(xp, ((0, Mp - n_nodes), (0, Kp - dim_in)))
    xp = xp.astype(compute_dtype)

    # fc + ReLU fused in one MXU kernel (f32 accumulation).  Output stays
    # padded (no intermediate slice -> no extra HBM pass before aggregation).
    h = _linear_relu_padded(xp, wt, bp, tm=tm, tn=tn, tk=tk)        # (Mp, Np) f32

    # Dropout is identity in eval/inference mode.
    # TODO(synk): training-mode dropout (pltpu.prng_seed / prng_random_bits).
    # TODO(synk): for tiny graphs, fuse fc+aggregation into a single
    # pallas_call with h resident in VMEM to remove the h HBM round-trip.

    # ---- neighbor tables for the gather kernel (long node axis last: SMEM
    # pads a 2-D [R, C] table to [ceil(R/8)*8, ceil(C/128)*128] words) ----
    counts = nbr_mask.sum(axis=1)                                     # [N] int
    inv_cnt = jnp.where(counts > 0, 1.0 / jnp.maximum(counts, 1), 0.0)  # 0-deg guard
    nbr_w_t = (nbr_mask.astype(jnp.float32)
               * inv_cnt[:, None]).astype(jnp.float32).T              # (max_deg, N)
    nbr_idx_t = jnp.where(nbr_mask, nbr_idx, 0).astype(jnp.int32).T   # (max_deg, N)
    # TODO(synk): for graphs where the (max_deg, N) tables exceed SMEM, tile
    # the node axis and prefetch per-tile tables instead.

    pooled = _gather_mean(h, nbr_idx_t, nbr_w_t, n_nodes)             # (N, Np) f32
    return pooled[:, :dim_out] if Np != dim_out else pooled


if __name__ == "__main__":
    # Small shapes consistent with the module: N nodes, dim_in -> dim_out.
    n_nodes, dim_in, dim_out = 12, 32, 16
    max_deg = 4

    key = jax.random.PRNGKey(0)
    kf, kw, kb = jax.random.split(key, 3)

    feats = jax.random.normal(kf, (n_nodes, dim_in), dtype=jnp.float32)
    bound = 1.0 / (dim_in ** 0.5)
    weight = jax.random.uniform(kw, (dim_out, dim_in), minval=-bound,
                                maxval=bound, dtype=jnp.float32)
    bias = jax.random.uniform(kb, (dim_out,), minval=-bound, maxval=bound,
                              dtype=jnp.float32)

    # Deterministic edge_dict: node i has 1 + (i % max_deg) neighbors.
    edge_dict = [[(i + k) % n_nodes for k in range(1 + (i % max_deg))]
                 for i in range(n_nodes)]
    nbr_idx = jnp.array([e + [0] * (max_deg - len(e)) for e in edge_dict],
                        dtype=jnp.int32)
    nbr_mask = jnp.array([[True] * len(e) + [False] * (max_deg - len(e))
                          for e in edge_dict], dtype=bool)

    out = graph_convolution_forward(feats, weight, bias, nbr_idx, nbr_mask)
    out = jax.block_until_ready(out)

    # Reference 1: same bf16 input rounding as the kernel, f32 accumulation.
    f_bf = feats.astype(jnp.bfloat16).astype(jnp.float32)
    w_bf = weight.astype(jnp.bfloat16).astype(jnp.float32)
    h_bf = jnp.maximum(f_bf @ w_bf.T + bias, 0.0)
    pooled_bf = jnp.stack([jnp.mean(h_bf[jnp.array(e)], axis=0) for e in edge_dict])

    # Reference 2: pure f32 (exact module semantics), loose tolerance for bf16.
    h_f32 = jnp.maximum(feats @ weight.T + bias, 0.0)
    pooled_f32 = jnp.stack([jnp.mean(h_f32[jnp.array(e)], axis=0) for e in edge_dict])

    assert out.shape == (n_nodes, dim_out)
    assert jnp.allclose(out, pooled_bf, atol=1e-4, rtol=1e-4)
    assert jnp.allclose(out, pooled_f32, atol=5e-2, rtol=5e-2)

    print("KERNEL_OK")
</pallas_src>

<mosaic_0001>
module attributes {stable_mosaic.version = 11 : i64} {
  func.func @_linear_relu_kernel(%arg0: i32, %arg1: i32, %arg2: i32, %arg3: memref<16x256xbf16, #tpu.memory_space<vmem>>, %arg4: memref<256x128xbf16, #tpu.memory_space<vmem>>, %arg5: memref<1x128xf32, #tpu.memory_space<vmem>>, %arg6: memref<16x128xf32, #tpu.memory_space<vmem>>) attributes {dimension_semantics = [#tpu.dimension_semantics<parallel>, #tpu.dimension_semantics<parallel>, #tpu.dimension_semantics<arbitrary>], iteration_bounds = array<i64: 1, 1, 1>, scalar_prefetch = 0 : i64, scratch_operands = 0 : i64, tpu.core_type = #tpu.core_type<tc>, window_params = [{transform_indices = @transform_0, window_bounds = array<i64: 16, 256>}, {transform_indices = @transform_1, window_bounds = array<i64: 256, 128>}, {transform_indices = @transform_2, window_bounds = array<i64: 1, 128>}, {transform_indices = @transform_3, window_bounds = array<i64: 16, 128>}]} {
    %c0_i32 = arith.constant 0 : i32
    %0 = arith.cmpi eq, %arg2, %c0_i32 : i32
    %1 = arith.extui %0 : i1 to i32
    %c0_i32_0 = arith.constant 0 : i32
    %2 = arith.cmpi ne, %1, %c0_i32_0 : i32
    scf.if %2 {
      %cst_10 = arith.constant 0.000000e+00 : f32
      %12 = vector.broadcast %cst_10 : f32 to vector<16x128xf32>
      %c0_11 = arith.constant 0 : index
      %c0_12 = arith.constant 0 : index
      %13 = vector.load %arg6[%c0_11, %c0_12] : memref<16x128xf32, #tpu.memory_space<vmem>>, vector<16x128xf32>
      tpu.vector_store %arg6[%c0_11, %c0_12], %12 {strides = array<i32>} : memref<16x128xf32, #tpu.memory_space<vmem>>, vector<16x128xf32>,
    } else {
    }
    %c0 = arith.constant 0 : index
    %c0_1 = arith.constant 0 : index
    %3 = vector.load %arg6[%c0, %c0_1] : memref<16x128xf32, #tpu.memory_space<vmem>>, vector<16x128xf32>
    %c0_2 = arith.constant 0 : index
    %c0_3 = arith.constant 0 : index
    %4 = vector.load %arg3[%c0_2, %c0_3] : memref<16x256xbf16, #tpu.memory_space<vmem>>, vector<16x256xbf16>
    %c0_4 = arith.constant 0 : index
    %c0_5 = arith.constant 0 : index
    %5 = vector.load %arg4[%c0_4, %c0_5] : memref<256x128xbf16, #tpu.memory_space<vmem>>, vector<256x128xbf16>
    %cst = arith.constant dense<0.000000e+00> : vector<16x128xf32>
    %6 = tpu.matmul %4, %5, %cst {dimension_numbers = #tpu.dot_dimension_numbers<[1], [0], [0], [1], [0, 0, 1, 1], [], []>} : vector<16x256xbf16>, vector<256x128xbf16>, vector<16x128xf32> -> vector<16x128xf32>
    %7 = arith.addf %3, %6 : vector<16x128xf32>
    %c0_6 = arith.constant 0 : index
    %c0_7 = arith.constant 0 : index
    %8 = vector.load %arg6[%c0_6, %c0_7] : memref<16x128xf32, #tpu.memory_space<vmem>>, vector<16x128xf32>
    tpu.vector_store %arg6[%c0_6, %c0_7], %7 {strides = array<i32>} : memref<16x128xf32, #tpu.memory_space<vmem>>, vector<16x128xf32>,
    %c0_i32_8 = arith.constant 0 : i32
    %9 = arith.cmpi eq, %arg2, %c0_i32_8 : i32
    %10 = arith.extui %9 : i1 to i32
    %c0_i32_9 = arith.constant 0 : i32
    %11 = arith.cmpi ne, %10, %c0_i32_9 : i32
    scf.if %11 {
      %c0_10 = arith.constant 0 : index
      %c0_11 = arith.constant 0 : index
      %12 = vector.load %arg6[%c0_10, %c0_11] : memref<16x128xf32, #tpu.memory_space<vmem>>, vector<16x128xf32>
      %c0_12 = arith.constant 0 : index
      %c0_13 = arith.constant 0 : index
      %13 = vector.load %arg5[%c0_12, %c0_13] : memref<1x128xf32, #tpu.memory_space<vmem>>, vector<1x128xf32>
      %14 = vector.broadcast %13 : vector<1x128xf32> to vector<16x128xf32>
      %15 = arith.addf %12, %14 : vector<16x128xf32>
      %cst_14 = arith.constant 0.000000e+00 : f32
      %16 = vector.broadcast %cst_14 : f32 to vector<16x128xf32>
      %17 = arith.maximumf %15, %16 : vector<16x128xf32>
      %c0_15 = arith.constant 0 : index
      %c0_16 = arith.constant 0 : index
      %18 = vector.load %arg6[%c0_15, %c0_16] : memref<16x128xf32, #tpu.memory_space<vmem>>, vector<16x128xf32>
      tpu.vector_store %arg6[%c0_15, %c0_16], %17 {strides = array<i32>} : memref<16x128xf32, #tpu.memory_space<vmem>>, vector<16x128xf32>,
    } else {
    }
    return
  }
  func.func @transform_0(%arg0: i32, %arg1: i32, %arg2: i32) -> (i32, i32) {
    %c0_i32 = arith.constant 0 : i32
    return %arg0, %arg2 : i32, i32
  }
  func.func @transform_1(%arg0: i32, %arg1: i32, %arg2: i32) -> (i32, i32) {
    %c0_i32 = arith.constant 0 : i32
    return %arg2, %arg1 : i32, i32
  }
  func.func @transform_2(%arg0: i32, %arg1: i32, %arg2: i32) -> (i32, i32) {
    %c0_i32 = arith.constant 0 : i32
    %c0_i32_0 = arith.constant 0 : i32
    return %c0_i32, %arg1 : i32, i32
  }
  func.func @transform_3(%arg0: i32, %arg1: i32, %arg2: i32) -> (i32, i32) {
    %c0_i32 = arith.constant 0 : i32
    return %arg0, %arg1 : i32, i32
  }
}

</mosaic_0001>

<llo_original>
// kernel: tpu_custom_call.1
$region0: #{tpu_custom_call.1}
  #allocation0 [shape = 'u32[]', space=smem, size = 0x4, offset = 0x4, fixed_abs, tag = 'smem constant byte address 0x4 - core index']
  #allocation1 [shape = 'u32[72,128]{1,0:T(1,128)}', space=vmem, size = 0x9000, scoped, tag = 'internal scratch']
  %s0 = inlined_call_operand.hbm [shape: bf16[16,256], index: 0, kind: input, shape index: {}]
  %s1 = inlined_call_operand.hbm [shape: bf16[256,128], index: 1, kind: input, shape index: {}]
  %s2 = inlined_call_operand.vmem [shape: f32[1,128], index: 2, kind: input, shape index: {}]
  %s3 = inlined_call_operand.hbm [shape: f32[16,128], index: 3, kind: output, shape index: {}]
  %s4 = sld [smem:[#allocation0]]
  $region38: #{tpu_custom_call.1} parent=0
    _
  %s6 = ssub.s32 1, %s4
  %s7 = scalar_select 0, %s6, %s4
  $region1: #{tpu_custom_call.1} parent=0
    #allocation2 [shape = 'u8[8192]{0}', space=vmem, size = 0x2000, scoped, tag = 'input window, operand 0, single buffered']
    #allocation3 [shape = 's32[1]{0}', space=sflag, size = 0x4, scoped, tag = 'scoped memory for tpu_custom_call.1']
    #allocation4 [shape = 's32[1]{0}', space=sflag, size = 0x4, scoped, tag = 'scoped memory for tpu_custom_call.1']
    #allocation5 [shape = 'u8[65536]{0}', space=vmem, size = 0x10000, scoped, tag = 'input window, operand 1, single buffered']
    #allocation6 [shape = 's32[1]{0}', space=sflag, size = 0x4, scoped, tag = 'scoped memory for tpu_custom_call.1']
    #allocation7 [shape = 'u8[8192]{0}', space=vmem, size = 0x2000, scoped, tag = 'output window, operand 0, single buffered']
    %8 = vsyncpa [#allocation3], 0
    %9 = vsyncpa [#allocation6], 0
    %10 = vsyncpa [#allocation4], 0
    // Predicated region
    $region2: #{tpu_custom_call.1} parent=1 // pred_check
      _
    $region3: #{tpu_custom_call.1} parent=1 // pred_check_branch
      %12 = sbr.rel (0) target = $region5
    $region4: #{tpu_custom_call.1} parent=1 // pred_region
      %14 = vsyncadd [#allocation3], 0
      %s15 = sshll.u32 %s0, 4
      %s16 = int_to_ptr.hbm [resolvable:$true] %s15
      %s17 = sshll.u32 [#allocation2], 4
      %s18 = int_to_ptr.vmem [resolvable:$true] %s17
      %23 = dma.hbm_to_vmem [thread:$0]  %s16, 256, %s18, [#allocation3], 128, 128, 8
    $region5: #{tpu_custom_call.1} parent=1 // pred_fallthru
      _
    // Predicated region
    $region6: #{tpu_custom_call.1} parent=1 // pred_check
      _
    $region7: #{tpu_custom_call.1} parent=1 // pred_check_branch
      %25 = sbr.rel (0) target = $region9
    $region8: #{tpu_custom_call.1} parent=1 // pred_region
      %27 = vsyncadd [#allocation6], 0
      %s28 = sshll.u32 %s1, 4
      %s29 = int_to_ptr.hbm [resolvable:$true] %s28
      %s30 = sshll.u32 [#allocation5], 4
      %s31 = int_to_ptr.vmem [resolvable:$true] %s30
      %36 = dma.hbm_to_vmem [thread:$0]  %s29, 2048, %s31, [#allocation6], 64, 64, 4
    $region9: #{tpu_custom_call.1} parent=1 // pred_fallthru
      _
    // Predicated region
    $region10: #{tpu_custom_call.1} parent=1 // pred_check
      _
    $region11: #{tpu_custom_call.1} parent=1 // pred_check_branch
      %38 = sbr.rel (0) target = $region13
    $region12: #{tpu_custom_call.1} parent=1 // pred_region
      _
    $region13: #{tpu_custom_call.1} parent=1 // pred_fallthru
      _
    // Predicated region
    $region14: #{tpu_custom_call.1} parent=1 // pred_check
      _
    $region15: #{tpu_custom_call.1} parent=1 // pred_check_branch
      %40 = sbr.rel (0) target = $region17
    $region16: #{tpu_custom_call.1} parent=1 // pred_region
      %42 = dma.done [#allocation3], 256
    $region17: #{tpu_custom_call.1} parent=1 // pred_fallthru
      _
    // Predicated region
    $region18: #{tpu_custom_call.1} parent=1 // pred_check
      _
    $region19: #{tpu_custom_call.1} parent=1 // pred_check_branch
      %44 = sbr.rel (0) target = $region21
    $region20: #{tpu_custom_call.1} parent=1 // pred_region
      %46 = dma.done [#allocation6], 2048
    $region21: #{tpu_custom_call.1} parent=1 // pred_fallthru
      _
    %p47 = scmp.eq.s32.totalorder 0, 0
    // Predicated region
    $region22: #{tpu_custom_call.1} parent=1 // pred_check
      %p48 = pneg %p47
    $region23: #{tpu_custom_call.1} parent=1 // pred_check_branch
      %50 = sbr.rel (%p48) target = $region25
    $region24: #{tpu_custom_call.1} parent=1 // pred_region
      %51 = vst [vmem:[#allocation7] sm:$0xff] 0.0
      %52 = vst [vmem:[#allocation7 + $0x8] sm:$0xff] 0.0
    $region25: #{tpu_custom_call.1} parent=1 // pred_fallthru
      _
    %v53 = vld [vmem:[#allocation7] sm:$0xff]
    %v54 = vld [vmem:[#allocation7 + $0x8] sm:$0xff]
    %v55 = vld [vmem:[#allocation2] sm:$0xff]
    %v56 = vld [vmem:[#allocation2 + $0x8] sm:$0xff]
    %v57 = vld [vmem:[#allocation5] sm:$0xf]
    %v58 = vld [vmem:[#allocation5 + $0x4] sm:$0xf]
    %v59 = vld [vmem:[#allocation5 + $0x8] sm:$0xf]
    %v60 = vld [vmem:[#allocation5 + $0xc] sm:$0xf]
    %v61 = vld [vmem:[#allocation5 + $0x10] sm:$0xf]
    %v62 = vld [vmem:[#allocation5 + $0x14] sm:$0xf]
    %v63 = vld [vmem:[#allocation5 + $0x18] sm:$0xf]
    %v64 = vld [vmem:[#allocation5 + $0x1c] sm:$0xf]
    %v65 = vld [vmem:[#allocation5 + $0x20] sm:$0xf]
    %v66 = vld [vmem:[#allocation5 + $0x24] sm:$0xf]
    %v67 = vld [vmem:[#allocation5 + $0x28] sm:$0xf]
    %v68 = vld [vmem:[#allocation5 + $0x2c] sm:$0xf]
    %v69 = vld [vmem:[#allocation5 + $0x30] sm:$0xf]
    %v70 = vld [vmem:[#allocation5 + $0x34] sm:$0xf]
    %v71 = vld [vmem:[#allocation5 + $0x38] sm:$0xf]
    %v72 = vld [vmem:[#allocation5 + $0x3c] sm:$0xf]
    %v73 = vld [vmem:[#allocation5 + $0x40] sm:$0xf]
    %v74 = vld [vmem:[#allocation5 + $0x44] sm:$0xf]
    %v75 = vld [vmem:[#allocation5 + $0x48] sm:$0xf]
    %v76 = vld [vmem:[#allocation5 + $0x4c] sm:$0xf]
    %v77 = vld [vmem:[#allocation5 + $0x50] sm:$0xf]
    %v78 = vld [vmem:[#allocation5 + $0x54] sm:$0xf]
    %v79 = vld [vmem:[#allocation5 + $0x58] sm:$0xf]
    %v80 = vld [vmem:[#allocation5 + $0x5c] sm:$0xf]
    %v81 = vld [vmem:[#allocation5 + $0x60] sm:$0xf]
    %v82 = vld [vmem:[#allocation5 + $0x64] sm:$0xf]
    %v83 = vld [vmem:[#allocation5 + $0x68] sm:$0xf]
    %v84 = vld [vmem:[#allocation5 + $0x6c] sm:$0xf]
    %v85 = vld [vmem:[#allocation5 + $0x70] sm:$0xf]
    %v86 = vld [vmem:[#allocation5 + $0x74] sm:$0xf]
    %v87 = vld [vmem:[#allocation5 + $0x78] sm:$0xf]
    %v88 = vld [vmem:[#allocation5 + $0x7c] sm:$0xf]
    %v91 = vunpack.c.l.b16 %v55
    %v92 = vunpack.c.h.b16 %v55
    %v93 = vunpack.c.l.b16 %v56
    %v94 = vunpack.c.h.b16 %v56
    %v95 = vpack.c.b16 %v93, %v91
    %v96 = vpack.c.b16 %v94, %v92
    %v131 = vunpack.c.l.b16 %v57
    %v132 = vunpack.c.l.b16 %v58
    %v133 = vunpack.c.l.b16 %v59
    %v134 = vunpack.c.l.b16 %v60
    %v135 = vunpack.c.l.b16 %v61
    %v136 = vunpack.c.l.b16 %v62
    %v137 = vunpack.c.l.b16 %v63
    %v138 = vunpack.c.l.b16 %v64
    %v139 = vunpack.c.l.b16 %v65
    %v140 = vunpack.c.l.b16 %v66
    %v141 = vunpack.c.l.b16 %v67
    %v142 = vunpack.c.l.b16 %v68
    %v143 = vunpack.c.l.b16 %v69
    %v144 = vunpack.c.l.b16 %v70
    %v145 = vunpack.c.l.b16 %v71
    %v146 = vunpack.c.l.b16 %v72
    %v147 = vunpack.c.l.b16 %v73
    %v148 = vunpack.c.l.b16 %v74
    %v149 = vunpack.c.l.b16 %v75
    %v150 = vunpack.c.l.b16 %v76
    %v151 = vunpack.c.l.b16 %v77
    %v152 = vunpack.c.l.b16 %v78
    %v153 = vunpack.c.l.b16 %v79
    %v154 = vunpack.c.l.b16 %v80
    %v155 = vunpack.c.l.b16 %v81
    %v156 = vunpack.c.l.b16 %v82
    %v157 = vunpack.c.l.b16 %v83
    %v158 = vunpack.c.l.b16 %v84
    %v159 = vunpack.c.l.b16 %v85
    %v160 = vunpack.c.l.b16 %v86
    %v161 = vunpack.c.l.b16 %v87
    %v162 = vunpack.c.l.b16 %v88
    %v163 = vpack.c.b16 %v132, %v131
    %v164 = vpack.c.b16 %v134, %v133
    %v165 = vpack.c.b16 %v136, %v135
    %v166 = vpack.c.b16 %v138, %v137
    %v167 = vpack.c.b16 %v140, %v139
    %v168 = vpack.c.b16 %v142, %v141
    %v169 = vpack.c.b16 %v144, %v143
    %v170 = vpack.c.b16 %v146, %v145
    %v171 = vpack.c.b16 %v148, %v147
    %v172 = vpack.c.b16 %v150, %v149
    %v173 = vpack.c.b16 %v152, %v151
    %v174 = vpack.c.b16 %v154, %v153
    %v175 = vpack.c.b16 %v156, %v155
    %v176 = vpack.c.b16 %v158, %v157
    %v177 = vpack.c.b16 %v160, %v159
    %v178 = vpack.c.b16 %v162, %v161
    %195 = vmatpush.bf16.msra.mxu0 %v170
    %196 = vmatpush.bf16.msra.mxu0 %v169
    %197 = vmatpush.bf16.msra.mxu0 %v168
    %198 = vmatpush.bf16.msra.mxu0 %v167
    %199 = vmatpush.bf16.msra.mxu0 %v166
    %200 = vmatpush.bf16.msra.mxu0 %v165
    %201 = vmatpush.bf16.msra.mxu0 %v164
    %202 = vmatpush.bf16.msra.mxu0 %v163
    %203 = vmatmul.bf16.gmra.mxu0 %v95
    %v204 = vpop.f32.mrf.mxu0
    %v205 = vadd.f32 0.0, %v204
    %v206 = vpop.f32.mrf.mxu0
    %v207 = vadd.f32 0.0, %v206
    %208 = vdwg.mxu0
    %209 = vmatpush.bf16.msra.mxu0 %v178
    %210 = vmatpush.bf16.msra.mxu0 %v177
    %211 = vmatpush.bf16.msra.mxu0 %v176
    %212 = vmatpush.bf16.msra.mxu0 %v175
    %213 = vmatpush.bf16.msra.mxu0 %v174
    %214 = vmatpush.bf16.msra.mxu0 %v173
    %215 = vmatpush.bf16.msra.mxu0 %v172
    %216 = vmatpush.bf16.msra.mxu0 %v171
    %217 = vmatmul.bf16.gmra.mxu0 %v96
    %v218 = vpop.f32.mrf.mxu0
    %v219 = vadd.f32 %v205, %v218
    %v220 = vpop.f32.mrf.mxu0
    %v221 = vadd.f32 %v207, %v220
    %222 = vdwg.mxu0
    %v223 = vadd.f32 %v53, %v219
    %v224 = vadd.f32 %v54, %v221
    %225 = vst [vmem:[#allocation7] sm:$0xff] %v223
    %226 = vst [vmem:[#allocation7 + $0x8] sm:$0xff] %v224
    // Predicated region
    $region26: #{tpu_custom_call.1} parent=1 // pred_check
      %p227 = pneg %p47
    $region27: #{tpu_custom_call.1} parent=1 // pred_check_branch
      %229 = sbr.rel (%p227) target = $region29
    $region28: #{tpu_custom_call.1} parent=1 // pred_region
      %v230 = vld [vmem:[#allocation7] sm:$0xff]
      %v231 = vld [vmem:[#allocation7 + $0x8] sm:$0xff]
      %v232 = vld [vmem:[%s2] sm:$0x1]
      %v234 = vperm.slane %v232, 0
      %v236 = vadd.f32 %v230, %v234
      %v237 = vadd.f32 %v231, %v234
      %v238 = vmax.f32 %v236, 0.0
      %v239 = vmax.f32 %v237, 0.0
      %240 = vst [vmem:[#allocation7] sm:$0xff] %v238
      %241 = vst [vmem:[#allocation7 + $0x8] sm:$0xff] %v239
    $region29: #{tpu_custom_call.1} parent=1 // pred_fallthru
      _
    // Predicated region
    $region30: #{tpu_custom_call.1} parent=1 // pred_check
      _
    $region31: #{tpu_custom_call.1} parent=1 // pred_check_branch
      %243 = sbr.rel (0) target = $region33
    $region32: #{tpu_custom_call.1} parent=1 // pred_region
      %245 = vsyncadd [#allocation4], 0
      %s246 = sshll.u32 [#allocation7], 4
      %s247 = int_to_ptr.vmem [resolvable:$true] %s246
      %s248 = sshll.u32 %s3, 4
      %s249 = int_to_ptr.hbm [resolvable:$true] %s248
      %254 = dma.vmem_to_hbm [thread:$0]  %s247, 256, %s249, [#allocation4], 128, 128, 8
    $region33: #{tpu_custom_call.1} parent=1 // pred_fallthru
      _
    // Predicated region
    $region34: #{tpu_custom_call.1} parent=1 // pred_check
      _
    $region35: #{tpu_custom_call.1} parent=1 // pred_check_branch
      %256 = sbr.rel (0) target = $region37
    $region36: #{tpu_custom_call.1} parent=1 // pred_region
      %258 = dma.done [#allocation4], 256
    $region37: #{tpu_custom_call.1} parent=1 // pred_fallthru
      _
    %259 = vsyncpa [#allocation3], 1
    %260 = vsyncpa [#allocation6], 1
    %261 = vsyncpa [#allocation4], 1

</llo_original>
